<compile_context>
chip_gen: v6e
topology: v6e:2x2x1
jax: 0.10.0
libtpu: 0.0.40
codegen_flags: <defaults>
</compile_context>

<pallas_src>
import jax
import jax.numpy as jnp
from jax.experimental import pallas as pl
from jax.experimental.pallas import tpu as pltpu

KH, KW = 3, 3  # kernel size


def _make_conv3x3_kernel(N, H, W, out_dtype, w_is_pow2):
    HW = H * W

    def kernel(*refs):
        # Signature (pow2 W):     w_ref(SMEM 9,), b_ref(SMEM 1,), x_ref, o_ref
        # Signature (non-pow2 W): w_ref, b_ref, col_ref(VMEM 1,HW i32), x_ref, o_ref
        if w_is_pow2:
            w_ref, b_ref, x_ref, o_ref = refs
            col_ref = None
        else:
            w_ref, b_ref, col_ref, x_ref, o_ref = refs

        x = x_ref[...].astype(jnp.float32)  # widen in-kernel (no-op for f32 inputs)

        # Flattened lane index: row-boundary masks are plain compares on it;
        # column masks need (flat mod W) -> bit-and for power-of-two W, else a
        # precomputed column-index input (no vector integer divide on TPU).
        flat = jax.lax.broadcasted_iota(jnp.int32, (N, HW), 1)
        if w_is_pow2:
            col = jnp.bitwise_and(flat, W - 1)
        else:
            col = col_ref[...]  # (1, HW); broadcasts against (N, HW) masks below

        row_ok = {-1: flat >= W, 1: flat < (H - 1) * W}   # valid output rows for dh
        col_ok = {-1: col >= 1, 1: col < (W - 1)}         # valid output cols for dw

        terms = []
        for kh in range(KH):
            dh = kh - 1
            for kw in range(KW):
                dw = kw - 1
                off = dh * W + dw                          # flattened window offset
                wgt = w_ref[kh * KW + kw]
                if off == 0:
                    # Center tap: fold the bias in here (saves one vector add and
                    # shortens the final VALU chain before the store).
                    terms.append(wgt * x + b_ref[0])
                    continue
                # want term[k] = x[k + off] (zero outside the image):
                # roll(x, s)[k] = x[(k - s) mod HW]  =>  s = -off (mod HW)
                shifted = pltpu.roll(x, shift=(-off) % HW, axis=1)
                mask = None
                if dh != 0:
                    mask = row_ok[dh]
                if dw != 0:
                    cmask = col_ok[dw]
                    mask = cmask if mask is None else jnp.logical_and(mask, cmask)
                terms.append(wgt * jnp.where(mask, shifted, 0.0))

        # Pairwise (tree) reduction: dependency chain ~4 adds instead of ~9.
        while len(terms) > 1:
            nxt = [terms[i] + terms[i + 1] for i in range(0, len(terms) - 1, 2)]
            if len(terms) % 2:
                nxt.append(terms[-1])
            terms = nxt

        o_ref[...] = terms[0].astype(out_dtype)

    return kernel


def conv2d_3x3_same(x, weight, bias):
    """x: (N, 1, H, W); weight: (1, 1, 3, 3); bias: (1,). Returns (N, 1, H, W)."""
    N, C, H, W = x.shape
    assert C == 1, "module is Conv2d(1, 1, 3, padding=1)"
    HW = H * W
    out_dtype = x.dtype

    # Contiguous reshape only — no astype, so no extra HBM copy for bf16 callers.
    x_flat = x.reshape(N, HW)
    w_flat = weight.reshape(KH * KW).astype(jnp.float32)
    b = bias.reshape(1).astype(jnp.float32)

    w_is_pow2 = (W & (W - 1)) == 0

    in_specs = [
        pl.BlockSpec(memory_space=pltpu.SMEM),   # weights (9,)
        pl.BlockSpec(memory_space=pltpu.SMEM),   # bias (1,)
    ]
    args = [w_flat, b]
    if not w_is_pow2:
        col = (jnp.arange(HW, dtype=jnp.int32) % W).reshape(1, HW)
        in_specs.append(pl.BlockSpec(memory_space=pltpu.VMEM))   # col index (1, HW)
        args.append(col)
    in_specs.append(pl.BlockSpec(memory_space=pltpu.VMEM))       # x (N, HW)
    args.append(x_flat)

    itemsize = jnp.dtype(out_dtype).itemsize
    cost = pl.CostEstimate(
        flops=2 * KH * KW * N * HW,
        transcendentals=0,
        bytes_accessed=2 * N * HW * itemsize + (KH * KW + 1) * 4,
    )

    out_flat = pl.pallas_call(
        _make_conv3x3_kernel(N, H, W, out_dtype, w_is_pow2),
        out_shape=jax.ShapeDtypeStruct((N, HW), out_dtype),
        in_specs=in_specs,
        out_specs=pl.BlockSpec(memory_space=pltpu.VMEM),
        cost_estimate=cost,
    )(*args)

    return out_flat.reshape(N, 1, H, W)


def _reference(x, weight, bias):
    # Pure-JAX reference (NCHW conv, padding=1)
    return jax.lax.conv_general_dilated(
        x, weight, window_strides=(1, 1), padding="SAME",
        dimension_numbers=("NCHW", "OIHW", "NCHW"),
    ) + bias.reshape(1, 1, 1, 1)


if __name__ == "__main__":
    key = jax.random.PRNGKey(0)
    kx, kw, kb = jax.random.split(key, 3)

    # Small shapes consistent with the module: batch=2, channels=1, spatial=16
    N, C, H, W = 2, 1, 16, 16
    x = jax.random.normal(kx, (N, C, H, W), dtype=jnp.float32)

    # Deterministic parameter init (PyTorch-like uniform(-k, k), k = 1/sqrt(fan_in))
    fan_in = C * KH * KW
    bound = 1.0 / (fan_in ** 0.5)
    weight = jax.random.uniform(kw, (1, 1, KH, KW), jnp.float32, -bound, bound)
    bias = jax.random.uniform(kb, (1,), jnp.float32, -bound, bound)

    y = conv2d_3x3_same(x, weight, bias)
    y = jax.block_until_ready(y)

    y_ref = _reference(x, weight, bias)
    assert y.shape == (N, 1, H, W)
    assert jnp.allclose(y, y_ref, atol=1e-5, rtol=1e-5), "mismatch vs reference"
    print("KERNEL_OK")
</pallas_src>

<mosaic_0001>
module attributes {stable_mosaic.version = 11 : i64} {
  func.func @kernel(%arg0: memref<9xf32, #tpu.memory_space<smem>>, %arg1: memref<1xf32, #tpu.memory_space<smem>>, %arg2: memref<2x256xf32, #tpu.memory_space<vmem>>, %arg3: memref<2x256xf32, #tpu.memory_space<vmem>>) attributes {dimension_semantics = [], scalar_prefetch = 0 : i64, scratch_operands = 0 : i64, tpu.core_type = #tpu.core_type<tc>} {
    %c0 = arith.constant 0 : index
    %c0_0 = arith.constant 0 : index
    %0 = vector.load %arg2[%c0, %c0_0] : memref<2x256xf32, #tpu.memory_space<vmem>>, vector<2x256xf32>
    %1 = tpu.iota {dimensions = array<i32: 1>} : vector<2x256xi32>
    %c15_i32 = arith.constant 15 : i32
    %2 = vector.broadcast %c15_i32 : i32 to vector<2x256xi32>
    %3 = arith.andi %1, %2 : vector<2x256xi32>
    %c16_i32 = arith.constant 16 : i32
    %4 = vector.broadcast %c16_i32 : i32 to vector<2x256xi32>
    %5 = arith.cmpi sge, %1, %4 : vector<2x256xi32>
    %c240_i32 = arith.constant 240 : i32
    %6 = vector.broadcast %c240_i32 : i32 to vector<2x256xi32>
    %7 = arith.cmpi slt, %1, %6 : vector<2x256xi32>
    %c1_i32 = arith.constant 1 : i32
    %8 = vector.broadcast %c1_i32 : i32 to vector<2x256xi32>
    %9 = arith.cmpi sge, %3, %8 : vector<2x256xi32>
    %c15_i32_1 = arith.constant 15 : i32
    %10 = vector.broadcast %c15_i32_1 : i32 to vector<2x256xi32>
    %11 = arith.cmpi slt, %3, %10 : vector<2x256xi32>
    %c0_2 = arith.constant 0 : index
    %12 = memref.load %arg0[%c0_2] : memref<9xf32, #tpu.memory_space<smem>>
    %c17_i32 = arith.constant 17 : i32
    %13 = tpu.dynamic_rotate %0 by %c17_i32 dim 1 : vector<2x256xf32>, i32 -> vector<2x256xf32>
    %14 = arith.andi %5, %9 : vector<2x256xi1>
    %cst = arith.constant 0.000000e+00 : f32
    %15 = vector.broadcast %cst : f32 to vector<2x256xf32>
    %16 = arith.select %14, %13, %15 : vector<2x256xi1>, vector<2x256xf32>
    %17 = vector.broadcast %12 : f32 to vector<2x256xf32>
    %18 = arith.mulf %17, %16 : vector<2x256xf32>
    %c1 = arith.constant 1 : index
    %19 = memref.load %arg0[%c1] : memref<9xf32, #tpu.memory_space<smem>>
    %c16_i32_3 = arith.constant 16 : i32
    %20 = tpu.dynamic_rotate %0 by %c16_i32_3 dim 1 : vector<2x256xf32>, i32 -> vector<2x256xf32>
    %cst_4 = arith.constant 0.000000e+00 : f32
    %21 = vector.broadcast %cst_4 : f32 to vector<2x256xf32>
    %22 = arith.select %5, %20, %21 : vector<2x256xi1>, vector<2x256xf32>
    %23 = vector.broadcast %19 : f32 to vector<2x256xf32>
    %24 = arith.mulf %23, %22 : vector<2x256xf32>
    %c2 = arith.constant 2 : index
    %25 = memref.load %arg0[%c2] : memref<9xf32, #tpu.memory_space<smem>>
    %c15_i32_5 = arith.constant 15 : i32
    %26 = tpu.dynamic_rotate %0 by %c15_i32_5 dim 1 : vector<2x256xf32>, i32 -> vector<2x256xf32>
    %27 = arith.andi %5, %11 : vector<2x256xi1>
    %cst_6 = arith.constant 0.000000e+00 : f32
    %28 = vector.broadcast %cst_6 : f32 to vector<2x256xf32>
    %29 = arith.select %27, %26, %28 : vector<2x256xi1>, vector<2x256xf32>
    %30 = vector.broadcast %25 : f32 to vector<2x256xf32>
    %31 = arith.mulf %30, %29 : vector<2x256xf32>
    %c3 = arith.constant 3 : index
    %32 = memref.load %arg0[%c3] : memref<9xf32, #tpu.memory_space<smem>>
    %c1_i32_7 = arith.constant 1 : i32
    %33 = tpu.dynamic_rotate %0 by %c1_i32_7 dim 1 : vector<2x256xf32>, i32 -> vector<2x256xf32>
    %cst_8 = arith.constant 0.000000e+00 : f32
    %34 = vector.broadcast %cst_8 : f32 to vector<2x256xf32>
    %35 = arith.select %9, %33, %34 : vector<2x256xi1>, vector<2x256xf32>
    %36 = vector.broadcast %32 : f32 to vector<2x256xf32>
    %37 = arith.mulf %36, %35 : vector<2x256xf32>
    %c4 = arith.constant 4 : index
    %38 = memref.load %arg0[%c4] : memref<9xf32, #tpu.memory_space<smem>>
    %39 = vector.broadcast %38 : f32 to vector<2x256xf32>
    %40 = arith.mulf %39, %0 : vector<2x256xf32>
    %c0_9 = arith.constant 0 : index
    %41 = memref.load %arg1[%c0_9] : memref<1xf32, #tpu.memory_space<smem>>
    %42 = vector.broadcast %41 : f32 to vector<2x256xf32>
    %43 = arith.addf %40, %42 : vector<2x256xf32>
    %c5 = arith.constant 5 : index
    %44 = memref.load %arg0[%c5] : memref<9xf32, #tpu.memory_space<smem>>
    %c255_i32 = arith.constant 255 : i32
    %45 = tpu.dynamic_rotate %0 by %c255_i32 dim 1 : vector<2x256xf32>, i32 -> vector<2x256xf32>
    %cst_10 = arith.constant 0.000000e+00 : f32
    %46 = vector.broadcast %cst_10 : f32 to vector<2x256xf32>
    %47 = arith.select %11, %45, %46 : vector<2x256xi1>, vector<2x256xf32>
    %48 = vector.broadcast %44 : f32 to vector<2x256xf32>
    %49 = arith.mulf %48, %47 : vector<2x256xf32>
    %c6 = arith.constant 6 : index
    %50 = memref.load %arg0[%c6] : memref<9xf32, #tpu.memory_space<smem>>
    %c241_i32 = arith.constant 241 : i32
    %51 = tpu.dynamic_rotate %0 by %c241_i32 dim 1 : vector<2x256xf32>, i32 -> vector<2x256xf32>
    %52 = arith.andi %7, %9 : vector<2x256xi1>
    %cst_11 = arith.constant 0.000000e+00 : f32
    %53 = vector.broadcast %cst_11 : f32 to vector<2x256xf32>
    %54 = arith.select %52, %51, %53 : vector<2x256xi1>, vector<2x256xf32>
    %55 = vector.broadcast %50 : f32 to vector<2x256xf32>
    %56 = arith.mulf %55, %54 : vector<2x256xf32>
    %c7 = arith.constant 7 : index
    %57 = memref.load %arg0[%c7] : memref<9xf32, #tpu.memory_space<smem>>
    %c240_i32_12 = arith.constant 240 : i32
    %58 = tpu.dynamic_rotate %0 by %c240_i32_12 dim 1 : vector<2x256xf32>, i32 -> vector<2x256xf32>
    %cst_13 = arith.constant 0.000000e+00 : f32
    %59 = vector.broadcast %cst_13 : f32 to vector<2x256xf32>
    %60 = arith.select %7, %58, %59 : vector<2x256xi1>, vector<2x256xf32>
    %61 = vector.broadcast %57 : f32 to vector<2x256xf32>
    %62 = arith.mulf %61, %60 : vector<2x256xf32>
    %c8 = arith.constant 8 : index
    %63 = memref.load %arg0[%c8] : memref<9xf32, #tpu.memory_space<smem>>
    %c239_i32 = arith.constant 239 : i32
    %64 = tpu.dynamic_rotate %0 by %c239_i32 dim 1 : vector<2x256xf32>, i32 -> vector<2x256xf32>
    %65 = arith.andi %7, %11 : vector<2x256xi1>
    %cst_14 = arith.constant 0.000000e+00 : f32
    %66 = vector.broadcast %cst_14 : f32 to vector<2x256xf32>
    %67 = arith.select %65, %64, %66 : vector<2x256xi1>, vector<2x256xf32>
    %68 = vector.broadcast %63 : f32 to vector<2x256xf32>
    %69 = arith.mulf %68, %67 : vector<2x256xf32>
    %70 = arith.addf %18, %24 : vector<2x256xf32>
    %71 = arith.addf %31, %37 : vector<2x256xf32>
    %72 = arith.addf %43, %49 : vector<2x256xf32>
    %73 = arith.addf %56, %62 : vector<2x256xf32>
    %74 = arith.addf %70, %71 : vector<2x256xf32>
    %75 = arith.addf %72, %73 : vector<2x256xf32>
    %76 = arith.addf %74, %75 : vector<2x256xf32>
    %77 = arith.addf %76, %69 : vector<2x256xf32>
    %c0_15 = arith.constant 0 : index
    %c0_16 = arith.constant 0 : index
    %78 = vector.load %arg3[%c0_15, %c0_16] : memref<2x256xf32, #tpu.memory_space<vmem>>, vector<2x256xf32>
    tpu.vector_store %arg3[%c0_15, %c0_16], %77 {strides = array<i32>} : memref<2x256xf32, #tpu.memory_space<vmem>>, vector<2x256xf32>,
    return
  }
}

</mosaic_0001>

<llo_original>
// kernel: tpu_custom_call.1
$region0: #{tpu_custom_call.1}
  #allocation0 [shape = 'u32[]', space=smem, size = 0x4, offset = 0x4, fixed_abs, tag = 'smem constant byte address 0x4 - core index']
  #allocation1 [shape = 'u32[144,128]{1,0:T(1,128)}', space=vmem, size = 0x12000, scoped, tag = 'internal scratch']
  #allocation2 [shape = 'f32[1]{0:T(128)S(6)}', space=smem, size = 0x200, scoped, tag = 'scoped memory for tpu_custom_call.1']
  %s0 = inlined_call_operand.vmem [shape: f32[9], index: 0, kind: input, shape index: {}]
  %s1 = inlined_call_operand.<no memory space> [shape: f32[1], index: 1, kind: input, shape index: {}]
  %s2 = inlined_call_operand.hbm [shape: f32[2,256], index: 2, kind: input, shape index: {}]
  %s3 = inlined_call_operand.hbm [shape: f32[2,256], index: 3, kind: output, shape index: {}]
  %s4 = sld [smem:[#allocation0]]
  $region30: #{tpu_custom_call.1} parent=0
    _
  %s6 = ssub.s32 1, %s4
  %s7 = scalar_select 0, %s6, %s4
  %8 = sst [smem:[#allocation2]] %s1
  $region1: #{tpu_custom_call.1} parent=0
    #allocation3 [shape = 'u8[512]{0}', space=smem, size = 0x200, scoped, tag = 'input window, operand 0, single buffered']
    #allocation4 [shape = 's32[1]{0}', space=sflag, size = 0x4, scoped, tag = 'scoped memory for tpu_custom_call.1']
    #allocation5 [shape = 's32[1]{0}', space=sflag, size = 0x4, scoped, tag = 'scoped memory for tpu_custom_call.1']
    #allocation6 [shape = 's32[1]{0}', space=sflag, size = 0x4, scoped, tag = 'scoped memory for tpu_custom_call.1']
    #allocation7 [shape = 'u8[2048]{0}', space=vmem, size = 0x800, scoped, tag = 'input window, operand 2, single buffered']
    #allocation8 [shape = 'u8[2048]{0}', space=vmem, size = 0x800, scoped, tag = 'output window, operand 0, single buffered']
    %9 = vsyncpa [#allocation6], 0
    %10 = vsyncpa [#allocation4], 0
    %11 = vsyncpa [#allocation5], 0
    // Predicated region
    $region2: #{tpu_custom_call.1} parent=1 // pred_check
      _
    $region3: #{tpu_custom_call.1} parent=1 // pred_check_branch
      %13 = sbr.rel (0) target = $region5
    $region4: #{tpu_custom_call.1} parent=1 // pred_region
      %s15 = ssub.s32 16, 16
      %16 = vsyncadd [#allocation6], %s15
      %s18 = sshll.u32 %s0, 4
      %s19 = int_to_ptr.vmem [resolvable:$true] %s18
      %21 = dma.vmem_to_smem %s19, 16, [#allocation3], [#allocation6]
    $region5: #{tpu_custom_call.1} parent=1 // pred_fallthru
      _
    // Predicated region
    $region6: #{tpu_custom_call.1} parent=1 // pred_check
      _
    $region7: #{tpu_custom_call.1} parent=1 // pred_check_branch
      %23 = sbr.rel (0) target = $region9
    $region8: #{tpu_custom_call.1} parent=1 // pred_region
      _
    $region9: #{tpu_custom_call.1} parent=1 // pred_fallthru
      _
    // Predicated region
    $region10: #{tpu_custom_call.1} parent=1 // pred_check
      _
    $region11: #{tpu_custom_call.1} parent=1 // pred_check_branch
      %25 = sbr.rel (0) target = $region13
    $region12: #{tpu_custom_call.1} parent=1 // pred_region
      %s27 = ssub.s32 64, 64
      %28 = vsyncadd [#allocation4], %s27
      %s30 = sshll.u32 [#allocation7], 4
      %s31 = int_to_ptr.vmem [resolvable:$true] %s30
      %33 = dma.hbm_to_vmem [thread:$0]  %s2, 64, %s31, [#allocation4]
    $region13: #{tpu_custom_call.1} parent=1 // pred_fallthru
      _
    // Predicated region
    $region14: #{tpu_custom_call.1} parent=1 // pred_check
      _
    $region15: #{tpu_custom_call.1} parent=1 // pred_check_branch
      %35 = sbr.rel (0) target = $region17
    $region16: #{tpu_custom_call.1} parent=1 // pred_region
      %36 = dma.done [#allocation6], 16
    $region17: #{tpu_custom_call.1} parent=1 // pred_fallthru
      _
    // Predicated region
    $region18: #{tpu_custom_call.1} parent=1 // pred_check
      _
    $region19: #{tpu_custom_call.1} parent=1 // pred_check_branch
      %38 = sbr.rel (0) target = $region21
    $region20: #{tpu_custom_call.1} parent=1 // pred_region
      %39 = dma.done [#allocation4], 64
    $region21: #{tpu_custom_call.1} parent=1 // pred_fallthru
      _
    %40 = sfence
    %v41 = vld [vmem:[#allocation7] sm:$0xf]
    %v42 = vlaneseq
    %v43 = vand.u32 %v42, 127
    %v44 = vadd.s32 %v43, 128
    %v45 = vand.u32 %v43, 15
    %v46 = vand.u32 %v44, 15
    %vm47 = vcmp.ge.s32.totalorder %v43, 16
    %vm48 = vcmp.ge.s32.totalorder %v44, 16
    %vm49 = vcmp.lt.s32.totalorder %v43, 240
    %vm50 = vcmp.lt.s32.totalorder %v44, 240
    %vm51 = vcmp.ge.s32.totalorder %v45, 1
    %vm52 = vcmp.ge.s32.totalorder %v46, 1
    %vm53 = vcmp.lt.s32.totalorder %v45, 15
    %vm54 = vcmp.lt.s32.totalorder %v46, 15
    %s55 = sld [smem:[#allocation3]]
    %v58 = vunpack.c.l.s4 1983009808
    %v59 = vunpack.c.0.s8 %v58
    %v60 = vlaneseq
    %v61 = vshrl.u32 %v60, 7
    %v62 = vsub.s32 %v59, %v61
    %v63 = vrot.slane %v41, %v62
    %v64 = vcombine.high %v63, %v63
    %67 = vrot.lane.b32.xlu0 %v63, 17
    %v68 = vpop.permute.xlu0 %67
    %69 = vrot.lane.b32.xlu0 %v64, 17
    %v70 = vpop.permute.xlu0 %69
    %vm71 = vcmp.lt.s32.totalorder %v43, 17
    %v72 = vsel %vm71, %v68, %v70
    %v73 = vsel %vm71, %v70, %v68
    %vm74 = vmand %vm47, %vm51
    %vm75 = vmand %vm48, %vm52
    %v76 = vsel %vm74, %v73, 0.0
    %v77 = vsel %vm75, %v72, 0.0
    %v78 = vstv %s55
    %v79 = vmul.f32 %v78, %v76
    %v80 = vmul.f32 %v78, %v77
    %s81 = sld [smem:[#allocation3 + $0x1]]
    %82 = vrot.lane.b32.xlu0 %v63, 16
    %v83 = vpop.permute.xlu0 %82
    %84 = vrot.lane.b32.xlu0 %v64, 16
    %v85 = vpop.permute.xlu0 %84
    %vm86 = vcmp.lt.s32.totalorder %v43, 16
    %v87 = vsel %vm86, %v83, %v85
    %v88 = vsel %vm86, %v85, %v83
    %v89 = vsel %vm47, %v88, 0.0
    %v90 = vsel %vm48, %v87, 0.0
    %v91 = vstv %s81
    %v92 = vmul.f32 %v91, %v89
    %v93 = vmul.f32 %v91, %v90
    %s94 = sld [smem:[#allocation3 + $0x2]]
    %95 = vrot.lane.b32.xlu0 %v63, 15
    %v96 = vpop.permute.xlu0 %95
    %97 = vrot.lane.b32.xlu0 %v64, 15
    %v98 = vpop.permute.xlu0 %97
    %vm99 = vcmp.lt.s32.totalorder %v43, 15
    %v100 = vsel %vm99, %v96, %v98
    %v101 = vsel %vm99, %v98, %v96
    %vm102 = vmand %vm47, %vm53
    %vm103 = vmand %vm48, %vm54
    %v104 = vsel %vm102, %v101, 0.0
    %v105 = vsel %vm103, %v100, 0.0
    %v106 = vstv %s94
    %v107 = vmul.f32 %v106, %v104
    %v108 = vmul.f32 %v106, %v105
    %s109 = sld [smem:[#allocation3 + $0x3]]
    %110 = vrot.lane.b32.xlu0 %v63, 1
    %v111 = vpop.permute.xlu0 %110
    %112 = vrot.lane.b32.xlu0 %v64, 1
    %v113 = vpop.permute.xlu0 %112
    %vm114 = vcmp.lt.s32.totalorder %v43, 1
    %v115 = vsel %vm114, %v111, %v113
    %v116 = vsel %vm114, %v113, %v111
    %v117 = vsel %vm51, %v116, 0.0
    %v118 = vsel %vm52, %v115, 0.0
    %v119 = vstv %s109
    %v120 = vmul.f32 %v119, %v117
    %v121 = vmul.f32 %v119, %v118
    %s122 = sld [smem:[#allocation3 + $0x4]]
    %v123 = vstv %s122
    %v124 = vmul.f32 %v123, %v41
    %s125 = sld [smem:[#allocation2]]
    %v126 = vstv %s125
    %v127 = vadd.f32 %v124, %v126
    %s128 = sld [smem:[#allocation3 + $0x5]]
    %129 = vrot.lane.b32.xlu0 %v63, 127
    %v130 = vpop.permute.xlu0 %129
    %131 = vrot.lane.b32.xlu0 %v64, 127
    %v132 = vpop.permute.xlu0 %131
    %vm133 = vcmp.lt.s32.totalorder %v43, 127
    %v134 = vsel %vm133, %v130, %v132
    %v135 = vsel %vm133, %v132, %v130
    %v136 = vsel %vm53, %v134, 0.0
    %v137 = vsel %vm54, %v135, 0.0
    %v138 = vstv %s128
    %v139 = vmul.f32 %v138, %v136
    %v140 = vmul.f32 %v138, %v137
    %s141 = sld [smem:[#allocation3 + $0x6]]
    %142 = vrot.lane.b32.xlu0 %v63, 113
    %v143 = vpop.permute.xlu0 %142
    %144 = vrot.lane.b32.xlu0 %v64, 113
    %v145 = vpop.permute.xlu0 %144
    %vm146 = vcmp.lt.s32.totalorder %v43, 113
    %v147 = vsel %vm146, %v143, %v145
    %v148 = vsel %vm146, %v145, %v143
    %vm149 = vmand %vm49, %vm51
    %vm150 = vmand %vm50, %vm52
    %v151 = vsel %vm149, %v147, 0.0
    %v152 = vsel %vm150, %v148, 0.0
    %v153 = vstv %s141
    %v154 = vmul.f32 %v153, %v151
    %v155 = vmul.f32 %v153, %v152
    %s156 = sld [smem:[#allocation3 + $0x7]]
    %157 = vrot.lane.b32.xlu0 %v63, 112
    %v158 = vpop.permute.xlu0 %157
    %159 = vrot.lane.b32.xlu0 %v64, 112
    %v160 = vpop.permute.xlu0 %159
    %vm161 = vcmp.lt.s32.totalorder %v43, 112
    %v162 = vsel %vm161, %v158, %v160
    %v163 = vsel %vm161, %v160, %v158
    %v164 = vsel %vm49, %v162, 0.0
    %v165 = vsel %vm50, %v163, 0.0
    %v166 = vstv %s156
    %v167 = vmul.f32 %v166, %v164
    %v168 = vmul.f32 %v166, %v165
    %s169 = sld [smem:[#allocation3 + $0x8]]
    %170 = vrot.lane.b32.xlu0 %v63, 111
    %v171 = vpop.permute.xlu0 %170
    %172 = vrot.lane.b32.xlu0 %v64, 111
    %v173 = vpop.permute.xlu0 %172
    %vm174 = vcmp.lt.s32.totalorder %v43, 111
    %v175 = vsel %vm174, %v171, %v173
    %v176 = vsel %vm174, %v173, %v171
    %vm177 = vmand %vm49, %vm53
    %vm178 = vmand %vm50, %vm54
    %v179 = vsel %vm177, %v175, 0.0
    %v180 = vsel %vm178, %v176, 0.0
    %v181 = vstv %s169
    %v182 = vmul.f32 %v181, %v179
    %v183 = vmul.f32 %v181, %v180
    %v184 = vadd.f32 %v79, %v92
    %v185 = vadd.f32 %v80, %v93
    %v186 = vadd.f32 %v107, %v120
    %v187 = vadd.f32 %v108, %v121
    %v190 = vcombine.low %v139, %v140
    %v192 = vunpack.c.l.s4 1983009808
    %v193 = vunpack.c.0.s8 %v192
    %v194 = vlaneseq
    %v195 = vshrl.u32 %v194, 7
    %v196 = vsub.s32 %v193, %v195
    %v197 = vrot.slane %v190, %v196
    %v199 = vadd.f32 %v127, %v197
    %v200 = vadd.f32 %v154, %v167
    %v201 = vadd.f32 %v155, %v168
    %v202 = vadd.f32 %v184, %v186
    %v203 = vadd.f32 %v185, %v187
    %v206 = vcombine.low %v200, %v201
    %v208 = vunpack.c.l.s4 1983009808
    %v209 = vunpack.c.0.s8 %v208
    %v210 = vlaneseq
    %v211 = vshrl.u32 %v210, 7
    %v212 = vsub.s32 %v209, %v211
    %v213 = vrot.slane %v206, %v212
    %v215 = vadd.f32 %v199, %v213
    %v218 = vunpack.c.l.s4 1983009808
    %v219 = vunpack.c.0.s8 %v218
    %v220 = vlaneseq
    %v221 = vshrl.u32 %v220, 7
    %v222 = vsub.s32 %v219, %v221
    %v223 = vrot.slane %v215, %v222
    %v224 = vcombine.high %v223, %v223
    %v227 = vadd.f32 %v202, %v223
    %v228 = vadd.f32 %v203, %v224
    %v229 = vadd.f32 %v227, %v182
    %v230 = vadd.f32 %v228, %v183
    %v233 = vcombine.low %v229, %v230
    %v235 = vunpack.c.l.s4 1983009808
    %v236 = vunpack.c.0.s8 %v235
    %v237 = vlaneseq
    %v238 = vshrl.u32 %v237, 7
    %v239 = vsub.s32 %v236, %v238
    %v240 = vrot.slane %v233, %v239
    %242 = vst [vmem:[#allocation8] sm:$0xf] %v240
    // Predicated region
    $region22: #{tpu_custom_call.1} parent=1 // pred_check
      _
    $region23: #{tpu_custom_call.1} parent=1 // pred_check_branch
      %244 = sbr.rel (0) target = $region25
    $region24: #{tpu_custom_call.1} parent=1 // pred_region
      %s246 = ssub.s32 64, 64
      %247 = vsyncadd [#allocation5], %s246
      %s249 = sshll.u32 [#allocation8], 4
      %s250 = int_to_ptr.vmem [resolvable:$true] %s249
      %252 = dma.vmem_to_hbm [thread:$0]  %s250, 64, %s3, [#allocation5]
    $region25: #{tpu_custom_call.1} parent=1 // pred_fallthru
      _
    // Predicated region
    $region26: #{tpu_custom_call.1} parent=1 // pred_check
      _
    $region27: #{tpu_custom_call.1} parent=1 // pred_check_branch
      %254 = sbr.rel (0) target = $region29
    $region28: #{tpu_custom_call.1} parent=1 // pred_region
      %255 = dma.done [#allocation5], 64
    $region29: #{tpu_custom_call.1} parent=1 // pred_fallthru
      _
    %256 = vsyncpa [#allocation4], 1
    %257 = vsyncpa [#allocation5], 1
    %258 = vsyncpa [#allocation6], 1

</llo_original>
